<compile_context>
chip_gen: v7x
topology: tpu7x:2x2x1
jax: 0.10.0
libtpu: 0.0.40
codegen_flags: <defaults>
</compile_context>

<pallas_src>
import functools

import jax
import jax.numpy as jnp
from jax.experimental import pallas as pl
from jax.experimental.pallas import tpu as pltpu


# ---------------------------------------------------------------------------
# Kernel: streaming 1-nearest-neighbour (argmin) in feature space
# ---------------------------------------------------------------------------

def _corres_kernel(f1_ref, f2_ref,        # inputs
                   idx_ref,               # output (resident over ki, write-once)
                   best_ref, bidx_ref,    # scratch
                   *, tk):
    """One (batch, query-tile, candidate-tile) grid step.

    f1_ref  : [1, TQ, Cfa]  augmented query features  [f1, 1]
    f2_ref  : [1, TK, Cfa]  augmented candidates      [-2*f2, ||f2||^2]
    idx_ref : [1, 1, TQ]    int32 argmin index (written only at the last ki)
    best_ref: [TQ, 1]       running best (surrogate) distance
    bidx_ref: [TQ, 1]       running best global candidate index
    """
    ki = pl.program_id(2)

    @pl.when(ki == 0)
    def _():
        best_ref[...] = jnp.full_like(best_ref, jnp.inf)
        # bidx_ref needs no init: the first tile always wins (best == inf) for
        # finite inputs, so every row of bidx is overwritten at ki == 0.

    f1 = f1_ref[0]                                                 # [TQ, Cfa]
    f2 = f2_ref[0]                                                 # [TK, Cfa]

    # d[i, j] = ||f2[j]||^2 - 2 <f1[i], f2[j]>   (single MXU matmul; padded
    # candidate rows carry a 1e30 norm so they can never become the minimum).
    d = jax.lax.dot_general(f1, f2, (((1,), (1,)), ((), ())),
                            preferred_element_type=jnp.float32)    # [TQ, TK]

    # Per-tile argmin.  (argmin_p has no Mosaic lowering; built from a min
    # reduce + iota-select-min.  The ki*TK global offset is added on the
    # reduced [TQ, 1] vector, never on a full [TQ, TK] tensor.)
    m = jnp.min(d, axis=-1, keepdims=True)                         # [TQ, 1]
    col = jax.lax.broadcasted_iota(jnp.int32, d.shape, 1)          # [TQ, TK]
    loc = jnp.min(jnp.where(d == m, col, tk), axis=-1, keepdims=True)
    gidx = ki * tk + loc                                           # [TQ, 1]

    # Streaming update; strict '<' keeps the earlier (smaller-index) tile on
    # ties, matching smallest-index tie-breaking within a tile.
    # NOTE: non-finite inputs (NaN features) would defeat this update.
    upd = m < best_ref[...]                                        # [TQ, 1]
    best_ref[...] = jnp.where(upd, m, best_ref[...])
    bidx_ref[...] = jnp.where(upd, gidx, bidx_ref[...])

    @pl.when(ki == pl.num_programs(2) - 1)
    def _():
        # One-time sublane->lane relayout into the lane-dense output block.
        idx_ref[0, 0, :] = bidx_ref[:, 0]


# ---------------------------------------------------------------------------
# Wrapper (PyTorch channels-first layout in / out)
# ---------------------------------------------------------------------------

def _round_up(x, m):
    return ((x + m - 1) // m) * m


def pointconv_correspondences_forward(xyz1, xyz2, points1, points2):
    """
    xyz1:    [B, C, N1]   xyz2:    [B, C, N2]
    points1: [B, D1, N1]  points2: [B, D2, N2]
    Returns (corres1 [B,1,N1] int32, corres2 [B,1,N1] int32,
             direction_xyz [B,C,N1] float32) — same layout as the PyTorch module.
    """
    B, C, N1 = xyz1.shape
    N2 = xyz2.shape[-1]
    f32 = jnp.float32

    # channels-last
    x1 = jnp.transpose(xyz1, (0, 2, 1)).astype(f32)                # [B, N1, C]
    x2 = jnp.transpose(xyz2, (0, 2, 1)).astype(f32)                # [B, N2, C]
    p1 = jnp.transpose(points1, (0, 2, 1)).astype(f32)             # [B, N1, D1]
    p2 = jnp.transpose(points2, (0, 2, 1)).astype(f32)             # [B, N2, D2]
    f1 = jnp.concatenate([p1, x1], axis=-1)                        # [B, N1, Cf]
    f2 = jnp.concatenate([p2, x2], axis=-1)                        # [B, N2, Cf]

    # Tile sizes: 128-aligned (dense vregs / MXU tiles, lane-dense output),
    # big enough to amortize the ~0.35us per-step overhead, small enough that
    # the [TQ, TK] f32 temporaries + double-buffered inputs stay far below the
    # 32 MiB scoped-VMEM default on every TPU generation (incl. v7x's 64 MiB
    # physical VMEM).
    TQ = min(512, _round_up(N1, 128))
    TK = min(1024, _round_up(N2, 128))
    if B == 1 and 128 < N1 <= TQ:
        # v7x has two TensorCores: keep B * (N1p / TQ) >= 2 where possible so
        # both cores get work on the 'parallel' grid axes.
        TQ = _round_up((N1 + 1) // 2, 128)
    N1p = _round_up(N1, TQ)
    N2p = _round_up(N2, TK)

    # Augmented features (norm / -2 folded ONCE here, O(N*Cf), not per step):
    #   d' = f1aug @ f2aug^T = ||f2||^2 - 2<f1, f2>.
    f1aug = jnp.concatenate([f1, jnp.ones((B, N1, 1), f32)], axis=-1)
    norm2 = jnp.sum(f2 * f2, axis=-1, keepdims=True)               # [B, N2, 1]
    f2aug = jnp.concatenate([-2.0 * f2, norm2], axis=-1)           # [B, N2, Cfa]
    Cfa = f1aug.shape[-1]

    # Pad queries with zeros (their results are sliced off); pad candidates
    # with a huge norm so padded columns can never win (no in-kernel mask).
    f1aug = jnp.pad(f1aug, ((0, 0), (0, N1p - N1), (0, 0)))
    if N2p > N2:
        pad_block = jnp.concatenate(
            [jnp.zeros((B, N2p - N2, Cfa - 1), f32),
             jnp.full((B, N2p - N2, 1), 1e30, f32)], axis=-1)
        f2aug = jnp.concatenate([f2aug, pad_block], axis=1)

    kernel = functools.partial(_corres_kernel, tk=TK)

    idx_out = pl.pallas_call(
        kernel,
        out_shape=jax.ShapeDtypeStruct((B, 1, N1p), jnp.int32),
        grid=(B, N1p // TQ, N2p // TK),
        in_specs=[
            pl.BlockSpec((1, TQ, Cfa), lambda b, qi, ki: (b, qi, 0)),  # f1aug
            pl.BlockSpec((1, TK, Cfa), lambda b, qi, ki: (b, ki, 0)),  # f2aug
        ],
        out_specs=pl.BlockSpec((1, 1, TQ), lambda b, qi, ki: (b, 0, qi)),
        scratch_shapes=[pltpu.VMEM((TQ, 1), jnp.float32),   # running best dist
                        pltpu.VMEM((TQ, 1), jnp.int32)],    # running best idx
        compiler_params=pltpu.CompilerParams(
            dimension_semantics=("parallel", "parallel", "arbitrary")),
    )(f1aug, f2aug)

    # TODO(synk): torch returns int64 indices; int32 is used here (N2 < 2^31).
    corres1 = jnp.broadcast_to(
        jnp.arange(N1, dtype=jnp.int32)[None, None, :], (B, 1, N1))
    corres2 = idx_out[:, :, :N1]                                   # [B, 1, N1]

    # neighbor_xyz2 = xyz2[corres2]; direction = neighbor - xyz1.
    # Tiny O(B*N1*C) gather done outside the kernel (per the perf review).
    nbr = jnp.take_along_axis(x2, corres2[:, 0, :, None], axis=1)  # [B, N1, C]
    direction_xyz = jnp.transpose(nbr - x1, (0, 2, 1))             # [B, C, N1]
    return corres1, corres2, direction_xyz


# ---------------------------------------------------------------------------
# Demo
# ---------------------------------------------------------------------------

if __name__ == "__main__":
    B, C, N1, N2, D = 2, 3, 16, 16, 8

    key = jax.random.PRNGKey(0)
    k1, k2, k3, k4 = jax.random.split(key, 4)
    xyz1 = jax.random.normal(k1, (B, C, N1), jnp.float32)
    xyz2 = jax.random.normal(k2, (B, C, N2), jnp.float32)
    points1 = jax.random.normal(k3, (B, D, N1), jnp.float32)
    points2 = jax.random.normal(k4, (B, D, N2), jnp.float32)

    corres1, corres2, direction = pointconv_correspondences_forward(
        xyz1, xyz2, points1, points2)
    jax.block_until_ready((corres1, corres2, direction))

    assert corres1.shape == (B, 1, N1)
    assert corres2.shape == (B, 1, N1)
    assert direction.shape == (B, C, N1)

    # Plain-JAX reference (square_distance -> argmin -> gather -> diff).
    f1 = jnp.concatenate([jnp.transpose(points1, (0, 2, 1)),
                          jnp.transpose(xyz1, (0, 2, 1))], axis=-1)
    f2 = jnp.concatenate([jnp.transpose(points2, (0, 2, 1)),
                          jnp.transpose(xyz2, (0, 2, 1))], axis=-1)
    dref = (jnp.sum(f1 * f1, -1)[:, :, None] + jnp.sum(f2 * f2, -1)[:, None, :]
            - 2.0 * jnp.einsum('bnc,bmc->bnm', f1, f2))
    ref_idx = jnp.argmin(dref, axis=-1).astype(jnp.int32)          # [B, N1]
    x2l = jnp.transpose(xyz2, (0, 2, 1))
    x1l = jnp.transpose(xyz1, (0, 2, 1))
    nbr_ref = jnp.take_along_axis(x2l, ref_idx[..., None], axis=1)  # [B, N1, C]
    dir_ref = jnp.transpose(nbr_ref - x1l, (0, 2, 1))               # [B, C, N1]

    expected_c1 = jnp.broadcast_to(
        jnp.arange(N1, dtype=jnp.int32)[None, :], (B, N1))
    assert jnp.array_equal(corres1[:, 0, :], expected_c1)
    assert jnp.array_equal(corres2[:, 0, :], ref_idx)
    assert jnp.allclose(direction, dir_ref, atol=1e-5)

    print("KERNEL_OK")
</pallas_src>

<mosaic_0001>
module attributes {stable_mosaic.version = 11 : i64} {
  func.func @_corres_kernel(%arg0: i32, %arg1: i32, %arg2: i32, %arg3: memref<1x128x12xf32, #tpu.memory_space<vmem>>, %arg4: memref<1x128x12xf32, #tpu.memory_space<vmem>>, %arg5: memref<1x1x128xi32, #tpu.memory_space<vmem>>, %arg6: memref<128x1xf32, #tpu.memory_space<vmem>>, %arg7: memref<128x1xi32, #tpu.memory_space<vmem>>) attributes {dimension_semantics = [#tpu.dimension_semantics<parallel>, #tpu.dimension_semantics<parallel>, #tpu.dimension_semantics<arbitrary>], iteration_bounds = array<i64: 2, 1, 1>, scalar_prefetch = 0 : i64, scratch_operands = 2 : i64, tpu.core_type = #tpu.core_type<tc>, window_params = [{transform_indices = @transform_0, window_bounds = array<i64: 1, 128, 12>}, {transform_indices = @transform_1, window_bounds = array<i64: 1, 128, 12>}, {transform_indices = @transform_2, window_bounds = array<i64: 1, 1, 128>}]} {
    %c0_i32 = arith.constant 0 : i32
    %0 = arith.cmpi eq, %arg2, %c0_i32 : i32
    %1 = arith.extui %0 : i1 to i32
    %c0_i32_0 = arith.constant 0 : i32
    %2 = arith.cmpi ne, %1, %c0_i32_0 : i32
    scf.if %2 {
      %cst_21 = arith.constant 0x7F800000 : f32
      %31 = vector.broadcast %cst_21 : f32 to vector<128x1xf32>
      %c0_22 = arith.constant 0 : index
      %c0_23 = arith.constant 0 : index
      %32 = vector.load %arg6[%c0_22, %c0_23] : memref<128x1xf32, #tpu.memory_space<vmem>>, vector<128x1xf32>
      tpu.vector_store %arg6[%c0_22, %c0_23], %31 {strides = array<i32>} : memref<128x1xf32, #tpu.memory_space<vmem>>, vector<128x1xf32>,
    } else {
    }
    %c0 = arith.constant 0 : index
    %c0_1 = arith.constant 0 : index
    %c0_2 = arith.constant 0 : index
    %3 = vector.load %arg3[%c0, %c0_1, %c0_2] : memref<1x128x12xf32, #tpu.memory_space<vmem>>, vector<1x128x12xf32>
    %4 = vector.shape_cast %3 : vector<1x128x12xf32> to vector<128x12xf32>
    %c0_3 = arith.constant 0 : index
    %c0_4 = arith.constant 0 : index
    %c0_5 = arith.constant 0 : index
    %5 = vector.load %arg4[%c0_3, %c0_4, %c0_5] : memref<1x128x12xf32, #tpu.memory_space<vmem>>, vector<1x128x12xf32>
    %6 = vector.shape_cast %5 : vector<1x128x12xf32> to vector<128x12xf32>
    %cst = arith.constant dense<0.000000e+00> : vector<128x128xf32>
    %7 = tpu.matmul %4, %6, %cst {dimension_numbers = #tpu.dot_dimension_numbers<[1], [1], [0], [0], [0, 0, 1, 0], [], []>} : vector<128x12xf32>, vector<128x12xf32>, vector<128x128xf32> -> vector<128x128xf32>
    %cst_6 = arith.constant dense<0x7F800000> : vector<128xf32>
    %8 = vector.multi_reduction <minimumf>, %7, %cst_6 [1] : vector<128x128xf32> to vector<128xf32>
    %9 = vector.shape_cast %8 : vector<128xf32> to vector<128x1xf32>
    %10 = tpu.iota {dimensions = array<i32: 1>} : vector<128x128xi32>
    %11 = vector.broadcast %9 : vector<128x1xf32> to vector<128x128xf32>
    %12 = arith.cmpf oeq, %7, %11 : vector<128x128xf32>
    %c128_i32 = arith.constant 128 : i32
    %13 = vector.broadcast %c128_i32 : i32 to vector<128x128xi32>
    %14 = arith.select %12, %10, %13 : vector<128x128xi1>, vector<128x128xi32>
    %cst_7 = arith.constant dense<2147483647> : vector<128xi32>
    %15 = vector.multi_reduction <minsi>, %14, %cst_7 [1] : vector<128x128xi32> to vector<128xi32>
    %16 = vector.shape_cast %15 : vector<128xi32> to vector<128x1xi32>
    %c128_i32_8 = arith.constant 128 : i32
    %17 = arith.muli %arg2, %c128_i32_8 : i32
    %18 = vector.broadcast %17 : i32 to vector<128x1xi32>
    %19 = arith.addi %18, %16 : vector<128x1xi32>
    %c0_9 = arith.constant 0 : index
    %c0_10 = arith.constant 0 : index
    %20 = vector.load %arg6[%c0_9, %c0_10] : memref<128x1xf32, #tpu.memory_space<vmem>>, vector<128x1xf32>
    %21 = arith.cmpf olt, %9, %20 : vector<128x1xf32>
    %c0_11 = arith.constant 0 : index
    %c0_12 = arith.constant 0 : index
    %22 = vector.load %arg6[%c0_11, %c0_12] : memref<128x1xf32, #tpu.memory_space<vmem>>, vector<128x1xf32>
    %23 = arith.select %21, %9, %22 : vector<128x1xi1>, vector<128x1xf32>
    %c0_13 = arith.constant 0 : index
    %c0_14 = arith.constant 0 : index
    %24 = vector.load %arg6[%c0_13, %c0_14] : memref<128x1xf32, #tpu.memory_space<vmem>>, vector<128x1xf32>
    tpu.vector_store %arg6[%c0_13, %c0_14], %23 {strides = array<i32>} : memref<128x1xf32, #tpu.memory_space<vmem>>, vector<128x1xf32>,
    %c0_15 = arith.constant 0 : index
    %c0_16 = arith.constant 0 : index
    %25 = vector.load %arg7[%c0_15, %c0_16] : memref<128x1xi32, #tpu.memory_space<vmem>>, vector<128x1xi32>
    %26 = arith.select %21, %19, %25 : vector<128x1xi1>, vector<128x1xi32>
    %c0_17 = arith.constant 0 : index
    %c0_18 = arith.constant 0 : index
    %27 = vector.load %arg7[%c0_17, %c0_18] : memref<128x1xi32, #tpu.memory_space<vmem>>, vector<128x1xi32>
    tpu.vector_store %arg7[%c0_17, %c0_18], %26 {strides = array<i32>} : memref<128x1xi32, #tpu.memory_space<vmem>>, vector<128x1xi32>,
    %c0_i32_19 = arith.constant 0 : i32
    %28 = arith.cmpi eq, %arg2, %c0_i32_19 : i32
    %29 = arith.extui %28 : i1 to i32
    %c0_i32_20 = arith.constant 0 : i32
    %30 = arith.cmpi ne, %29, %c0_i32_20 : i32
    scf.if %30 {
      %c0_21 = arith.constant 0 : index
      %c0_22 = arith.constant 0 : index
      %31 = vector.load %arg7[%c0_21, %c0_22] : memref<128x1xi32, #tpu.memory_space<vmem>>, vector<128x1xi32>
      %32 = vector.shape_cast %31 : vector<128x1xi32> to vector<128xi32>
      %c0_23 = arith.constant 0 : index
      %c0_24 = arith.constant 0 : index
      %c0_25 = arith.constant 0 : index
      %33 = vector.load %arg5[%c0_23, %c0_24, %c0_25] : memref<1x1x128xi32, #tpu.memory_space<vmem>>, vector<1x1x128xi32>
      %34 = vector.shape_cast %33 : vector<1x1x128xi32> to vector<128xi32>
      %35 = vector.shape_cast %32 : vector<128xi32> to vector<1x1x128xi32>
      tpu.vector_store %arg5[%c0_23, %c0_24, %c0_25], %35 {strides = array<i32>} : memref<1x1x128xi32, #tpu.memory_space<vmem>>, vector<1x1x128xi32>,
    } else {
    }
    return
  }
  func.func @transform_0(%arg0: i32, %arg1: i32, %arg2: i32) -> (i32, i32, i32) {
    %c0_i32 = arith.constant 0 : i32
    %c0_i32_0 = arith.constant 0 : i32
    return %arg0, %arg1, %c0_i32 : i32, i32, i32
  }
  func.func @transform_1(%arg0: i32, %arg1: i32, %arg2: i32) -> (i32, i32, i32) {
    %c0_i32 = arith.constant 0 : i32
    %c0_i32_0 = arith.constant 0 : i32
    return %arg0, %arg2, %c0_i32 : i32, i32, i32
  }
  func.func @transform_2(%arg0: i32, %arg1: i32, %arg2: i32) -> (i32, i32, i32) {
    %c0_i32 = arith.constant 0 : i32
    %c0_i32_0 = arith.constant 0 : i32
    return %arg0, %c0_i32, %arg1 : i32, i32, i32
  }
}

</mosaic_0001>

<llo_original>
// kernel: tpu_custom_call.1
$region0: #{tpu_custom_call.1}
  #allocation0 [shape = 'u32[]', space=smem, size = 0x4, offset = 0x4, fixed_abs, tag = 'smem constant byte address 0x4 - core index']
  #allocation1 [shape = 'u32[144,128]{1,0:T(1,128)}', space=vmem, size = 0x12000, scoped, tag = 'internal scratch']
  #allocation2 [shape = 'f32[128,1]{1,0:T(8,128)}', space=vmem, size = 0x10000, scoped, tag = 'scratch operand']
  #allocation3 [shape = 's32[128,1]{1,0:T(8,128)}', space=vmem, size = 0x10000, scoped, tag = 'scratch operand']
  %s0 = inlined_call_operand.vmem [shape: f32[2,128,12], index: 0, kind: input, shape index: {}]
  %s1 = inlined_call_operand.vmem [shape: f32[2,128,12], index: 1, kind: input, shape index: {}]
  %s2 = inlined_call_operand.hbm [shape: s32[2,1,128], index: 2, kind: output, shape index: {}]
  %s3 = sld [smem:[#allocation0]]
  $region49: #{tpu_custom_call.1} parent=0
    _
  %s5 = ssub.s32 1, %s3
  %s6 = scalar_select 0, %s5, %s3
  $region1: #{tpu_custom_call.1} parent=0
    #allocation4 [shape = 'u8[1024]{0}', space=vmem, size = 0x400, scoped, tag = 'output window, operand 0']
    #allocation5 [shape = 's32[2]{0}', space=sflag, size = 0x8, scoped, tag = 'scoped memory for tpu_custom_call.1']
    %7 = vsyncpa [#allocation5], 0
    %s8 = scalar_lea.sflag [#allocation5], 1
    %9 = vsyncpa %s8, 0
    loop: start=0, step=1, limit=4
    $region2: #{tpu_custom_call.1} parent=1 // loop_pre_header
      _
    $region3: #{tpu_custom_call.1} parent=1 // loop_header
      %s11 = sphi 0, %s15
      %p12 = scmp.ge.s32.totalorder %s11, 4
      %s18 = sphi 0, %s37
      %s19 = sphi 0, %s33
      %s20 = sphi 0, %s29
      %s21 = sphi 0, %s18
      %s22 = sphi 0, %s19
      %s23 = sphi 0, %s20
      %s24 = sphi 0, %s21
      %s25 = sphi 0, %s22
      %s26 = sphi 0, %s23
      %s42 = sphi 0, %s44
      %s45 = sphi 0, %s42
      %s46 = sphi 0, %s45
      %s62 = sphi 0, %s46
      %s70 = sphi 0, %s72
      %s73 = sphi 0, %s70
      %s74 = sphi 0, %s73
      %s90 = sphi 0, %s74
      %s98 = sphi 0, %s100
      %s101 = sphi 0, %s98
      %s102 = sphi 0, %s101
      %s118 = sphi 0, %s102
    $region4: #{tpu_custom_call.1} parent=1 // loop_header_branch
      %14 = sbr.rel (%p12) target = $region8
    $region5: #{tpu_custom_call.1} parent=1 // loop_body
      %s16 = ssub.s32 %s11, 1
      %s17 = ssub.s32 %s11, 2
      %s27 = sadd.s32 1, %s20
      %p28 = scmp.ge.s32.totalorder %s27, 1
      %s29 = scalar_select %p28, 0, %s27
      %s30 = sadd.s32 1, %s19
      %s31 = scalar_select %p28, %s30, %s19
      %p32 = scmp.ge.s32.totalorder %s31, 1
      %s33 = scalar_select %p32, 0, %s31
      %s34 = sadd.s32 1, %s18
      %s35 = scalar_select %p32, %s34, %s18
      %p36 = scmp.ge.s32.totalorder %s35, 2
      %s37 = scalar_select %p36, 0, %s35
      %s38 = ssub.s32 %s18, %s37
      %s39 = ssub.s32 %s19, %s33
      %s40 = sor.u32 %s38, %s39
      %p41 = scmp.eq.s32.totalorder %s40, 0
      %s43 = sadd.s32 %s42, 1
      %s44 = scalar_select %p41, %s42, %s43
      %p47 = pneg %p41
      %p48 = scmp.eq.s32.totalorder %s11, 1
      %p49 = por %p47, %p48
      %p50 = scmp.ne.s32.totalorder %s42, %s45
      %p51 = scmp.eq.s32.totalorder %s11, 0
      %p52 = por %p50, %p51
      %p53 = scmp.ne.s32.totalorder %s42, %s45
      %p54 = scmp.eq.s32.totalorder %s16, 1
      %p55 = por %p53, %p54
      %p56 = scmp.ne.s32.totalorder %s45, %s46
      %p57 = scmp.eq.s32.totalorder %s16, 0
      %p58 = por %p56, %p57
      %p59 = scmp.ne.s32.totalorder %s45, %s46
      %p60 = scmp.eq.s32.totalorder %s17, 1
      %p61 = por %p59, %p60
      %p63 = scmp.ne.s32.totalorder %s46, %s62
      %p64 = scmp.eq.s32.totalorder %s17, 0
      %p65 = por %p63, %p64
      %s66 = ssub.s32 %s18, %s37
      %s67 = ssub.s32 %s20, %s29
      %s68 = sor.u32 %s66, %s67
      %p69 = scmp.eq.s32.totalorder %s68, 0
      %s71 = sadd.s32 %s70, 1
      %s72 = scalar_select %p69, %s70, %s71
      %p75 = pneg %p69
      %p76 = scmp.eq.s32.totalorder %s11, 1
      %p77 = por %p75, %p76
      %p78 = scmp.ne.s32.totalorder %s70, %s73
      %p79 = scmp.eq.s32.totalorder %s11, 0
      %p80 = por %p78, %p79
      %p81 = scmp.ne.s32.totalorder %s70, %s73
      %p82 = scmp.eq.s32.totalorder %s16, 1
      %p83 = por %p81, %p82
      %p84 = scmp.ne.s32.totalorder %s73, %s74
      %p85 = scmp.eq.s32.totalorder %s16, 0
      %p86 = por %p84, %p85
      %p87 = scmp.ne.s32.totalorder %s73, %s74
      %p88 = scmp.eq.s32.totalorder %s17, 1
      %p89 = por %p87, %p88
      %p91 = scmp.ne.s32.totalorder %s74, %s90
      %p92 = scmp.eq.s32.totalorder %s17, 0
      %p93 = por %p91, %p92
      %s94 = ssub.s32 %s18, %s37
      %s95 = ssub.s32 %s19, %s33
      %s96 = sor.u32 %s94, %s95
      %p97 = scmp.eq.s32.totalorder %s96, 0
      %s99 = sadd.s32 %s98, 1
      %s100 = scalar_select %p97, %s98, %s99
      %p103 = pneg %p97
      %p104 = scmp.eq.s32.totalorder %s11, 1
      %p105 = por %p103, %p104
      %p106 = scmp.ne.s32.totalorder %s98, %s101
      %p107 = scmp.eq.s32.totalorder %s11, 0
      %p108 = por %p106, %p107
      %p109 = scmp.ne.s32.totalorder %s98, %s101
      %p110 = scmp.eq.s32.totalorder %s16, 1
      %p111 = por %p109, %p110
      %p112 = scmp.ne.s32.totalorder %s101, %s102
      %p113 = scmp.eq.s32.totalorder %s16, 0
      %p114 = por %p112, %p113
      %p115 = scmp.ne.s32.totalorder %s101, %s102
      %p116 = scmp.eq.s32.totalorder %s17, 1
      %p117 = por %p115, %p116
      %p119 = scmp.ne.s32.totalorder %s102, %s118
      %p120 = scmp.eq.s32.totalorder %s17, 0
      %p121 = por %p119, %p120
      %p122 = scmp.le.s32.totalorder 1, %s11
      %p123 = scmp.lt.s32.totalorder %s11, 3
      %p124 = pnand %p122, %p123
      %p125 = pneg %p124
      // Predicated region
      $region9: #{tpu_custom_call.1} parent=5 // pred_check
        _
      $region10: #{tpu_custom_call.1} parent=5 // pred_check_branch
        %127 = sbr.rel (%p124) target = $region12
      $region11: #{tpu_custom_call.1} parent=5 // pred_region
        %s128 = ssub.s32 %s11, 1
      $region12: #{tpu_custom_call.1} parent=5 // pred_fallthru
        _
      %p129 = scmp.lt.s32.totalorder %s11, 2
      // Predicated region
      $region13: #{tpu_custom_call.1} parent=5 // pred_check
        %p130 = pneg %p129
      $region14: #{tpu_custom_call.1} parent=5 // pred_check_branch
        %132 = sbr.rel (%p130) target = $region16
      $region15: #{tpu_custom_call.1} parent=5 // pred_region
        // Predicated region
        $region17: #{tpu_custom_call.1} parent=15 // pred_check
          %p133 = pneg %p52
        $region18: #{tpu_custom_call.1} parent=15 // pred_check_branch
          %135 = sbr.rel (%p133) target = $region20
        $region19: #{tpu_custom_call.1} parent=15 // pred_region
          %s136 = smul.u32 16, %s19
          %p137 = scmp.lt.s32.totalorder %s18, 1
          %s138 = scalar_select %p137, %s18, 1
          %p139 = scmp.lt.s32.totalorder %s136, 15
          %s140 = scalar_select %p139, %s136, 15
          %s141 = smul.addr %s138, 16
          %s142 = sadd.s32 %s140, %s141
          %s143 = smul.addr %s142, 8
          %s144 = scalar_lea.vmem %s0, %s143
          %s145 = smul.u32 16, %s19
        $region20: #{tpu_custom_call.1} parent=15 // pred_fallthru
          _
        // Predicated region
        $region21: #{tpu_custom_call.1} parent=15 // pred_check
          %p146 = pneg %p80
        $region22: #{tpu_custom_call.1} parent=15 // pred_check_branch
          %148 = sbr.rel (%p146) target = $region24
        $region23: #{tpu_custom_call.1} parent=15 // pred_region
          %s149 = smul.u32 16, %s20
          %p150 = scmp.lt.s32.totalorder %s18, 1
          %s151 = scalar_select %p150, %s18, 1
          %p152 = scmp.lt.s32.totalorder %s149, 15
          %s153 = scalar_select %p152, %s149, 15
          %s154 = smul.addr %s151, 16
          %s155 = sadd.s32 %s153, %s154
          %s156 = smul.addr %s155, 8
          %s157 = scalar_lea.vmem %s1, %s156
          %s158 = smul.u32 16, %s20
        $region24: #{tpu_custom_call.1} parent=15 // pred_fallthru
          _
      $region16: #{tpu_custom_call.1} parent=5 // pred_fallthru
        _
      %p159 = scmp.le.s32.totalorder 1, %s11
      %p160 = scmp.lt.s32.totalorder %s11, 3
      %p161 = pnand %p159, %p160
      %p162 = pneg %p161
      // Predicated region
      $region25: #{tpu_custom_call.1} parent=5 // pred_check
        _
      $region26: #{tpu_custom_call.1} parent=5 // pred_check_branch
        %164 = sbr.rel (%p161) target = $region28
      $region27: #{tpu_custom_call.1} parent=5 // pred_region
        %s165 = ssub.s32 %s11, 1
        %s166 = smul.u32 16, %s22
        %p167 = scmp.lt.s32.totalorder %s21, 1
        %s168 = scalar_select %p167, %s21, 1
        %p169 = scmp.lt.s32.totalorder %s166, 15
        %s170 = scalar_select %p169, %s166, 15
        %s171 = smul.addr %s168, 16
        %s172 = sadd.s32 %s170, %s171
        %s173 = smul.addr %s172, 8
        %s174 = scalar_lea.vmem %s0, %s173
        %p175 = pneg %p58
        %p176 = pneg %p55
        %s177 = smul.u32 16, %s23
        %p178 = scmp.lt.s32.totalorder %s21, 1
        %s179 = scalar_select %p178, %s21, 1
        %p180 = scmp.lt.s32.totalorder %s177, 15
        %s181 = scalar_select %p180, %s177, 15
        %s182 = smul.addr %s179, 16
        %s183 = sadd.s32 %s181, %s182
        %s184 = smul.addr %s183, 8
        %s185 = scalar_lea.vmem %s1, %s184
        %p186 = pneg %p86
        %p187 = pneg %p83
        %p188 = pneg %p114
        %p189 = pneg %p111
        %s190 = sand.u32 %s101, 1
        %s191 = scalar_lea.sflag [#allocation5], %s190
        %s192 = sand.u32 %s101, 1
        %s193 = scalar_lea.vmem [#allocation4], %s192
        %s194 = smul.u32 16, %s22
        %p195 = scmp.lt.s32.totalorder %s21, 1
        %s196 = scalar_select %p195, %s21, 1
        %p197 = scmp.lt.s32.totalorder %s194, 15
        %s198 = scalar_select %p197, %s194, 15
        %s199 = smul.addr %s196, 16
        %s200 = sadd.s32 %s198, %s199
        %s201 = smul.addr %s200, 8
        %s202 = scalar_lea.vmem %s0, %s201
        %s203 = smul.u32 16, %s22
        %s204 = smul.u32 16, %s23
        %p205 = scmp.lt.s32.totalorder %s21, 1
        %s206 = scalar_select %p205, %s21, 1
        %p207 = scmp.lt.s32.totalorder %s204, 15
        %s208 = scalar_select %p207, %s204, 15
        %s209 = smul.addr %s206, 16
        %s210 = sadd.s32 %s208, %s209
        %s211 = smul.addr %s210, 8
        %s212 = scalar_lea.vmem %s1, %s211
        %s213 = smul.u32 16, %s23
        %p214 = scmp.eq.s32.totalorder %s23, 0
        // Predicated region
        $region29: #{tpu_custom_call.1} parent=27 // pred_check
          %p215 = pneg %p214
        $region30: #{tpu_custom_call.1} parent=27 // pred_check_branch
          %217 = sbr.rel (%p215) target = $region32
        $region31: #{tpu_custom_call.1} parent=27 // pred_region
          %vm218 = vcmask 7168
          %219 = vst.msk [vmem:[#allocation2] sm:$0xff] %vm218, inf
          %220 = vst.msk [vmem:[#allocation2 + $0x8] sm:$0xff] %vm218, inf
          %221 = vst.msk [vmem:[#allocation2 + $0x10] sm:$0xff] %vm218, inf
          %222 = vst.msk [vmem:[#allocation2 + $0x18] sm:$0xff] %vm218, inf
          %223 = vst.msk [vmem:[#allocation2 + $0x20] sm:$0xff] %vm218, inf
          %224 = vst.msk [vmem:[#allocation2 + $0x28] sm:$0xff] %vm218, inf
          %225 = vst.msk [vmem:[#allocation2 + $0x30] sm:$0xff] %vm218, inf
          %226 = vst.msk [vmem:[#allocation2 + $0x38] sm:$0xff] %vm218, inf
          %227 = vst.msk [vmem:[#allocation2 + $0x40] sm:$0xff] %vm218, inf
          %228 = vst.msk [vmem:[#allocation2 + $0x48] sm:$0xff] %vm218, inf
          %229 = vst.msk [vmem:[#allocation2 + $0x50] sm:$0xff] %vm218, inf
          %230 = vst.msk [vmem:[#allocation2 + $0x58] sm:$0xff] %vm218, inf
          %231 = vst.msk [vmem:[#allocation2 + $0x60] sm:$0xff] %vm218, inf
          %232 = vst.msk [vmem:[#allocation2 + $0x68] sm:$0xff] %vm218, inf
          %233 = vst.msk [vmem:[#allocation2 + $0x70] sm:$0xff] %vm218, inf
          %234 = vst.msk [vmem:[#allocation2 + $0x78] sm:$0xff] %vm218, inf
        $region32: #{tpu_custom_call.1} parent=27 // pred_fallthru
          _
        %v235 = vld [vmem:[%s202] sm:$0xff]
        %v236 = vld [vmem:[%s202 + $0x8] sm:$0xff]
        %v237 = vld [vmem:[%s202 + $0x10] sm:$0xff]
        %v238 = vld [vmem:[%s202 + $0x18] sm:$0xff]
        %v239 = vld [vmem:[%s202 + $0x20] sm:$0xff]
        %v240 = vld [vmem:[%s202 + $0x28] sm:$0xff]
        %v241 = vld [vmem:[%s202 + $0x30] sm:$0xff]
        %v242 = vld [vmem:[%s202 + $0x38] sm:$0xff]
        %v243 = vld [vmem:[%s202 + $0x40] sm:$0xff]
        %v244 = vld [vmem:[%s202 + $0x48] sm:$0xff]
        %v245 = vld [vmem:[%s202 + $0x50] sm:$0xff]
        %v246 = vld [vmem:[%s202 + $0x58] sm:$0xff]
        %v247 = vld [vmem:[%s202 + $0x60] sm:$0xff]
        %v248 = vld [vmem:[%s202 + $0x68] sm:$0xff]
        %v249 = vld [vmem:[%s202 + $0x70] sm:$0xff]
        %v250 = vld [vmem:[%s202 + $0x78] sm:$0xff]
        %v251 = vld [vmem:[%s212] sm:$0xff]
        %v252 = vld [vmem:[%s212 + $0x8] sm:$0xff]
        %v253 = vld [vmem:[%s212 + $0x10] sm:$0xff]
        %v254 = vld [vmem:[%s212 + $0x18] sm:$0xff]
        %v255 = vld [vmem:[%s212 + $0x20] sm:$0xff]
        %v256 = vld [vmem:[%s212 + $0x28] sm:$0xff]
        %v257 = vld [vmem:[%s212 + $0x30] sm:$0xff]
        %v258 = vld [vmem:[%s212 + $0x38] sm:$0xff]
        %v259 = vld [vmem:[%s212 + $0x40] sm:$0xff]
        %v260 = vld [vmem:[%s212 + $0x48] sm:$0xff]
        %v261 = vld [vmem:[%s212 + $0x50] sm:$0xff]
        %v262 = vld [vmem:[%s212 + $0x58] sm:$0xff]
        %v263 = vld [vmem:[%s212 + $0x60] sm:$0xff]
        %v264 = vld [vmem:[%s212 + $0x68] sm:$0xff]
        %v265 = vld [vmem:[%s212 + $0x70] sm:$0xff]
        %v266 = vld [vmem:[%s212 + $0x78] sm:$0xff]
        %vm267 = vcmask 97280
        %v269 = vsel %vm267, %v235, 0
        %v272 = vsel %vm267, %v236, 0
        %v275 = vsel %vm267, %v237, 0
        %v278 = vsel %vm267, %v238, 0
        %v281 = vsel %vm267, %v239, 0
        %v284 = vsel %vm267, %v240, 0
        %v287 = vsel %vm267, %v241, 0
        %v290 = vsel %vm267, %v242, 0
        %v293 = vsel %vm267, %v243, 0
        %v296 = vsel %vm267, %v244, 0
        %v299 = vsel %vm267, %v245, 0
        %v302 = vsel %vm267, %v246, 0
        %v305 = vsel %vm267, %v247, 0
        %v308 = vsel %vm267, %v248, 0
        %v311 = vsel %vm267, %v249, 0
        %v314 = vsel %vm267, %v250, 0
        %v317 = vsel %vm267, %v251, 0
        %v320 = vsel %vm267, %v252, 0
        %v323 = vsel %vm267, %v253, 0
        %v326 = vsel %vm267, %v254, 0
        %v329 = vsel %vm267, %v255, 0
        %v332 = vsel %vm267, %v256, 0
        %v335 = vsel %vm267, %v257, 0
        %v338 = vsel %vm267, %v258, 0
        %v341 = vsel %vm267, %v259, 0
        %v344 = vsel %vm267, %v260, 0
        %v347 = vsel %vm267, %v261, 0
        %v350 = vsel %vm267, %v262, 0
        %v353 = vsel %vm267, %v263, 0
        %v356 = vsel %vm267, %v264, 0
        %v359 = vsel %vm267, %v265, 0
        %v362 = vsel %vm267, %v266, 0
        %364 = vmatprep.subr.mxu0 0.0
        %365 = vmatpush1.xpose.msra.mxu0 %v317
        %366 = vmatprep.subr.mxu0 0.0
        %367 = vmatpush1.xpose.msra.mxu0 %v320
        %368 = vmatprep.subr.mxu0 0.0
        %369 = vmatpush1.xpose.msra.mxu0 %v323
        %370 = vmatprep.subr.mxu0 0.0
        %371 = vmatpush1.xpose.msra.mxu0 %v326
        %372 = vmatprep.subr.mxu0 0.0
        %373 = vmatpush1.xpose.msra.mxu0 %v329
        %374 = vmatprep.subr.mxu0 0.0
        %375 = vmatpush1.xpose.msra.mxu0 %v332
        %376 = vmatprep.subr.mxu0 0.0
        %377 = vmatpush1.xpose.msra.mxu0 %v335
        %378 = vmatprep.subr.mxu0 0.0
        %379 = vmatpush1.xpose.msra.mxu0 %v338
        %380 = vmatprep.subr.mxu0 0.0
        %381 = vmatpush1.xpose.msra.mxu0 %v341
        %382 = vmatprep.subr.mxu0 0.0
        %383 = vmatpush1.xpose.msra.mxu0 %v344
        %384 = vmatprep.subr.mxu0 0.0
        %385 = vmatpush1.xpose.msra.mxu0 %v347
        %386 = vmatprep.subr.mxu0 0.0
        %387 = vmatpush1.xpose.msra.mxu0 %v350
        %388 = vmatprep.subr.mxu0 0.0
        %389 = vmatpush1.xpose.msra.mxu0 %v353
        %390 = vmatprep.subr.mxu0 0.0
        %391 = vmatpush1.xpose.msra.mxu0 %v356
        %392 = vmatprep.subr.mxu0 0.0
        %393 = vmatpush1.xpose.msra.mxu0 %v359
        %394 = vmatprep.subr.mxu0 0.0
        %395 = vmatpush1.xpose.msra.mxu0 %v362
        %396 = vmatprep.subr.mxu0 0.0
        %397 = vmatpush1.xpose.msra.mxu0 0.0
        %398 = vmatprep.subr.mxu0 0.0
        %399 = vmatpush1.xpose.msra.mxu0 0.0
        %400 = vmatprep.subr.mxu0 0.0
        %401 = vmatpush1.xpose.msra.mxu0 0.0
        %402 = vmatprep.subr.mxu0 0.0
        %403 = vmatpush1.xpose.msra.mxu0 0.0
        %404 = vmatprep.subr.mxu0 0.0
        %405 = vmatpush1.xpose.msra.mxu0 0.0
        %406 = vmatprep.subr.mxu0 0.0
        %407 = vmatpush1.xpose.msra.mxu0 0.0
        %408 = vmatprep.subr.mxu0 0.0
        %409 = vmatpush1.xpose.msra.mxu0 0.0
        %410 = vmatprep.subr.mxu0 0.0
        %411 = vmatpush1.xpose.msra.mxu0 0.0
        %412 = vmatprep.subr.mxu0 0.0
        %413 = vmatpush1.xpose.msra.mxu0 0.0
        %414 = vmatprep.subr.mxu0 0.0
        %415 = vmatpush1.xpose.msra.mxu0 0.0
        %416 = vmatprep.subr.mxu0 0.0
        %417 = vmatpush1.xpose.msra.mxu0 0.0
        %418 = vmatprep.subr.mxu0 0.0
        %419 = vmatpush1.xpose.msra.mxu0 0.0
        %420 = vmatprep.subr.mxu0 0.0
        %421 = vmatpush1.xpose.msra.mxu0 0.0
        %422 = vmatprep.subr.mxu0 0.0
        %423 = vmatpush1.xpose.msra.mxu0 0.0
        %424 = vmatprep.subr.mxu0 0.0
        %425 = vmatpush1.xpose.msra.mxu0 0.0
        %426 = vmatprep.subr.mxu0 0.0
        %427 = vmatpush1.xpose.msra.mxu0 0.0
        %428 = vmatprep.mubr.f32.mxu0 0.0
        %429 = vmatmul.mubr.f32.gmra.mrb[0].mxu0 %v269
        %v430 = vpop.f32.mrb[0].mxu0
        %v431 = vadd.f32 0.0, %v430
        %v432 = vpop.f32.mrb[0].mxu0
        %433 = vmatprep.mubr.f32.mxu0 0.0
        %434 = vmatmul.mubr.f32.gmra.mrb[0].mxu0 %v272
        %v435 = vpop.f32.mrb[0].mxu0
        %v436 = vadd.f32 0.0, %v435
        %v437 = vpop.f32.mrb[0].mxu0
        %438 = vmatprep.mubr.f32.mxu0 0.0
        %439 = vmatmul.mubr.f32.gmra.mrb[0].mxu0 %v275
        %v440 = vpop.f32.mrb[0].mxu0
        %v441 = vadd.f32 0.0, %v440
        %v442 = vpop.f32.mrb[0].mxu0
        %443 = vmatprep.mubr.f32.mxu0 0.0
        %444 = vmatmul.mubr.f32.gmra.mrb[0].mxu0 %v278
        %v445 = vpop.f32.mrb[0].mxu0
        %v446 = vadd.f32 0.0, %v445
        %v447 = vpop.f32.mrb[0].mxu0
        %448 = vmatprep.mubr.f32.mxu0 0.0
        %449 = vmatmul.mubr.f32.gmra.mrb[0].mxu0 %v281
        %v450 = vpop.f32.mrb[0].mxu0
        %v451 = vadd.f32 0.0, %v450
        %v452 = vpop.f32.mrb[0].mxu0
        %453 = vmatprep.mubr.f32.mxu0 0.0
        %454 = vmatmul.mubr.f32.gmra.mrb[0].mxu0 %v284
        %v455 = vpop.f32.mrb[0].mxu0
        %v456 = vadd.f32 0.0, %v455
        %v457 = vpop.f32.mrb[0].mxu0
        %458 = vmatprep.mubr.f32.mxu0 0.0
        %459 = vmatmul.mubr.f32.gmra.mrb[0].mxu0 %v287
        %v460 = vpop.f32.mrb[0].mxu0
        %v461 = vadd.f32 0.0, %v460
        %v462 = vpop.f32.mrb[0].mxu0
        %463 = vmatprep.mubr.f32.mxu0 0.0
        %464 = vmatmul.mubr.f32.gmra.mrb[0].mxu0 %v290
        %v465 = vpop.f32.mrb[0].mxu0
        %v466 = vadd.f32 0.0, %v465
        %v467 = vpop.f32.mrb[0].mxu0
        %468 = vmatprep.mubr.f32.mxu0 0.0
        %469 = vmatmul.mubr.f32.gmra.mrb[0].mxu0 %v293
        %v470 = vpop.f32.mrb[0].mxu0
        %v471 = vadd.f32 0.0, %v470
        %v472 = vpop.f32.mrb[0].mxu0
        %473 = vmatprep.mubr.f32.mxu0 0.0
        %474 = vmatmul.mubr.f32.gmra.mrb[0].mxu0 %v296
        %v475 = vpop.f32.mrb[0].mxu0
        %v476 = vadd.f32 0.0, %v475
        %v477 = vpop.f32.mrb[0].mxu0
        %478 = vmatprep.mubr.f32.mxu0 0.0
        %479 = vmatmul.mubr.f32.gmra.mrb[0].mxu0 %v299
        %v480 = vpop.f32.mrb[0].mxu0
        %v481 = vadd.f32 0.0, %v480
        %v482 = vpop.f32.mrb[0].mxu0
        %483 = vmatprep.mubr.f32.mxu0 0.0
        %484 = vmatmul.mubr.f32.gmra.mrb[0].mxu0 %v302
        %v485 = vpop.f32.mrb[0].mxu0
        %v486 = vadd.f32 0.0, %v485
        %v487 = vpop.f32.mrb[0].mxu0
        %488 = vmatprep.mubr.f32.mxu0 0.0
        %489 = vmatmul.mubr.f32.gmra.mrb[0].mxu0 %v305
        %v490 = vpop.f32.mrb[0].mxu0
        %v491 = vadd.f32 0.0, %v490
        %v492 = vpop.f32.mrb[0].mxu0
        %493 = vmatprep.mubr.f32.mxu0 0.0
        %494 = vmatmul.mubr.f32.gmra.mrb[0].mxu0 %v308
        %v495 = vpop.f32.mrb[0].mxu0
        %v496 = vadd.f32 0.0, %v495
        %v497 = vpop.f32.mrb[0].mxu0
        %498 = vmatprep.mubr.f32.mxu0 0.0
        %499 = vmatmul.mubr.f32.gmra.mrb[0].mxu0 %v311
        %v500 = vpop.f32.mrb[0].mxu0
        %v501 = vadd.f32 0.0, %v500
        %v502 = vpop.f32.mrb[0].mxu0
        %503 = vmatprep.mubr.f32.mxu0 0.0
        %504 = vmatmul.mubr.f32.gmra.mrb[0].mxu0 %v314
        %v505 = vpop.f32.mrb[0].mxu0
        %v506 = vadd.f32 0.0, %v505
        %v507 = vpop.f32.mrb[0].mxu0
        %508 = vdwg.mxu0
        %509 = vmin.xlane.f32.xlu0 %v431
        %v510 = vpop.xlane.xlu0 %509
        %511 = vmin.xlane.f32.xlu0 %v436
        %v512 = vpop.xlane.xlu0 %511
        %513 = vmin.xlane.f32.xlu0 %v441
        %v514 = vpop.xlane.xlu0 %513
        %515 = vmin.xlane.f32.xlu0 %v446
        %v516 = vpop.xlane.xlu0 %515
        %517 = vmin.xlane.f32.xlu0 %v451
        %v518 = vpop.xlane.xlu0 %517
        %519 = vmin.xlane.f32.xlu0 %v456
        %v520 = vpop.xlane.xlu0 %519
        %521 = vmin.xlane.f32.xlu0 %v461
        %v522 = vpop.xlane.xlu0 %521
        %523 = vmin.xlane.f32.xlu0 %v466
        %v524 = vpop.xlane.xlu0 %523
        %525 = vmin.xlane.f32.xlu0 %v471
        %v526 = vpop.xlane.xlu0 %525
        %527 = vmin.xlane.f32.xlu0 %v476
        %v528 = vpop.xlane.xlu0 %527
        %529 = vmin.xlane.f32.xlu0 %v481
        %v530 = vpop.xlane.xlu0 %529
        %531 = vmin.xlane.f32.xlu0 %v486
        %v532 = vpop.xlane.xlu0 %531
        %533 = vmin.xlane.f32.xlu0 %v491
        %v534 = vpop.xlane.xlu0 %533
        %535 = vmin.xlane.f32.xlu0 %v496
        %v536 = vpop.xlane.xlu0 %535
        %537 = vmin.xlane.f32.xlu0 %v501
        %v538 = vpop.xlane.xlu0 %537
        %539 = vmin.xlane.f32.xlu0 %v506
        %v540 = vpop.xlane.xlu0 %539
        %v541 = vlaneseq
        %v542 = vand.u32 %v541, 127
        %vm543 = vcmp.eq.f32.partialorder %v431, %v510
        %vm544 = vcmp.eq.f32.partialorder %v436, %v512
        %vm545 = vcmp.eq.f32.partialorder %v441, %v514
        %vm546 = vcmp.eq.f32.partialorder %v446, %v516
        %vm547 = vcmp.eq.f32.partialorder %v451, %v518
        %vm548 = vcmp.eq.f32.partialorder %v456, %v520
        %vm549 = vcmp.eq.f32.partialorder %v461, %v522
        %vm550 = vcmp.eq.f32.partialorder %v466, %v524
        %vm551 = vcmp.eq.f32.partialorder %v471, %v526
        %vm552 = vcmp.eq.f32.partialorder %v476, %v528
        %vm553 = vcmp.eq.f32.partialorder %v481, %v530
        %vm554 = vcmp.eq.f32.partialorder %v486, %v532
        %vm555 = vcmp.eq.f32.partialorder %v491, %v534
        %vm556 = vcmp.eq.f32.partialorder %v496, %v536
        %vm557 = vcmp.eq.f32.partialorder %v501, %v538
        %vm558 = vcmp.eq.f32.partialorder %v506, %v540
        %v559 = vsel %vm543, %v542, 128
        %v560 = vsel %vm544, %v542, 128
        %v561 = vsel %vm545, %v542, 128
        %v562 = vsel %vm546, %v542, 128
        %v563 = vsel %vm547, %v542, 128
        %v564 = vsel %vm548, %v542, 128
        %v565 = vsel %vm549, %v542, 128
        %v566 = vsel %vm550, %v542, 128
        %v567 = vsel %vm551, %v542, 128
        %v568 = vsel %vm552, %v542, 128
        %v569 = vsel %vm553, %v542, 128
        %v570 = vsel %vm554, %v542, 128
        %v571 = vsel %vm555, %v542, 128
        %v572 = vsel %vm556, %v542, 128
        %v573 = vsel %vm557, %v542, 128
        %v574 = vsel %vm558, %v542, 128
        %v575 = vand.u32 %v559, 65535
        %v576 = vshra.s32 %v559, 16
        %v577 = vcvt.s32.f32 %v575
        %v578 = vcvt.s32.f32 %v576
        %579 = vmin.xlane.f32.xlu0 %v578
        %v580 = vpop.xlane.xlu0 %579
        %vm581 = vcmp.eq.f32.partialorder %v578, %v580
        %v582 = vsel %vm581, %v577, inf
        %583 = vmin.xlane.f32.xlu0 %v582
        %v584 = vpop.xlane.xlu0 %583
        %v585 = vcvt.f32.s32 %v584
        %v586 = vcvt.f32.s32 %v580
        %v587 = vshll.u32 %v586, 16
        %v588 = vadd.s32 %v587, %v585
        %v589 = vand.u32 %v560, 65535
        %v590 = vshra.s32 %v560, 16
        %v591 = vcvt.s32.f32 %v589
        %v592 = vcvt.s32.f32 %v590
        %593 = vmin.xlane.f32.xlu0 %v592
        %v594 = vpop.xlane.xlu0 %593
        %vm595 = vcmp.eq.f32.partialorder %v592, %v594
        %v596 = vsel %vm595, %v591, inf
        %597 = vmin.xlane.f32.xlu0 %v596
        %v598 = vpop.xlane.xlu0 %597
        %v599 = vcvt.f32.s32 %v598
        %v600 = vcvt.f32.s32 %v594
        %v601 = vshll.u32 %v600, 16
        %v602 = vadd.s32 %v601, %v599
        %v603 = vand.u32 %v561, 65535
        %v604 = vshra.s32 %v561, 16
        %v605 = vcvt.s32.f32 %v603
        %v606 = vcvt.s32.f32 %v604
        %607 = vmin.xlane.f32.xlu0 %v606
        %v608 = vpop.xlane.xlu0 %607
        %vm609 = vcmp.eq.f32.partialorder %v606, %v608
        %v610 = vsel %vm609, %v605, inf
        %611 = vmin.xlane.f32.xlu0 %v610
        %v612 = vpop.xlane.xlu0 %611
        %v613 = vcvt.f32.s32 %v612
        %v614 = vcvt.f32.s32 %v608
        %v615 = vshll.u32 %v614, 16
        %v616 = vadd.s32 %v615, %v613
        %v617 = vand.u32 %v562, 65535
        %v618 = vshra.s32 %v562, 16
        %v619 = vcvt.s32.f32 %v617
        %v620 = vcvt.s32.f32 %v618
        %621 = vmin.xlane.f32.xlu0 %v620
        %v622 = vpop.xlane.xlu0 %621
        %vm623 = vcmp.eq.f32.partialorder %v620, %v622
        %v624 = vsel %vm623, %v619, inf
        %625 = vmin.xlane.f32.xlu0 %v624
        %v626 = vpop.xlane.xlu0 %625
        %v627 = vcvt.f32.s32 %v626
        %v628 = vcvt.f32.s32 %v622
        %v629 = vshll.u32 %v628, 16
        %v630 = vadd.s32 %v629, %v627
        %v631 = vand.u32 %v563, 65535
        %v632 = vshra.s32 %v563, 16
        %v633 = vcvt.s32.f32 %v631
        %v634 = vcvt.s32.f32 %v632
        %635 = vmin.xlane.f32.xlu0 %v634
        %v636 = vpop.xlane.xlu0 %635
        %vm637 = vcmp.eq.f32.partialorder %v634, %v636
        %v638 = vsel %vm637, %v633, inf
        %639 = vmin.xlane.f32.xlu0 %v638
        %v640 = vpop.xlane.xlu0 %639
        %v641 = vcvt.f32.s32 %v640
        %v642 = vcvt.f32.s32 %v636
        %v643 = vshll.u32 %v642, 16
        %v644 = vadd.s32 %v643, %v641
        %v645 = vand.u32 %v564, 65535
        %v646 = vshra.s32 %v564, 16
        %v647 = vcvt.s32.f32 %v645
        %v648 = vcvt.s32.f32 %v646
        %649 = vmin.xlane.f32.xlu0 %v648
        %v650 = vpop.xlane.xlu0 %649
        %vm651 = vcmp.eq.f32.partialorder %v648, %v650
        %v652 = vsel %vm651, %v647, inf
        %653 = vmin.xlane.f32.xlu0 %v652
        %v654 = vpop.xlane.xlu0 %653
        %v655 = vcvt.f32.s32 %v654
        %v656 = vcvt.f32.s32 %v650
        %v657 = vshll.u32 %v656, 16
        %v658 = vadd.s32 %v657, %v655
        %v659 = vand.u32 %v565, 65535
        %v660 = vshra.s32 %v565, 16
        %v661 = vcvt.s32.f32 %v659
        %v662 = vcvt.s32.f32 %v660
        %663 = vmin.xlane.f32.xlu0 %v662
        %v664 = vpop.xlane.xlu0 %663
        %vm665 = vcmp.eq.f32.partialorder %v662, %v664
        %v666 = vsel %vm665, %v661, inf
        %667 = vmin.xlane.f32.xlu0 %v666
        %v668 = vpop.xlane.xlu0 %667
        %v669 = vcvt.f32.s32 %v668
        %v670 = vcvt.f32.s32 %v664
        %v671 = vshll.u32 %v670, 16
        %v672 = vadd.s32 %v671, %v669
        %v673 = vand.u32 %v566, 65535
        %v674 = vshra.s32 %v566, 16
        %v675 = vcvt.s32.f32 %v673
        %v676 = vcvt.s32.f32 %v674
        %677 = vmin.xlane.f32.xlu0 %v676
        %v678 = vpop.xlane.xlu0 %677
        %vm679 = vcmp.eq.f32.partialorder %v676, %v678
        %v680 = vsel %vm679, %v675, inf
        %681 = vmin.xlane.f32.xlu0 %v680
        %v682 = vpop.xlane.xlu0 %681
        %v683 = vcvt.f32.s32 %v682
        %v684 = vcvt.f32.s32 %v678
        %v685 = vshll.u32 %v684, 16
        %v686 = vadd.s32 %v685, %v683
        %v687 = vand.u32 %v567, 65535
        %v688 = vshra.s32 %v567, 16
        %v689 = vcvt.s32.f32 %v687
        %v690 = vcvt.s32.f32 %v688
        %691 = vmin.xlane.f32.xlu0 %v690
        %v692 = vpop.xlane.xlu0 %691
        %vm693 = vcmp.eq.f32.partialorder %v690, %v692
        %v694 = vsel %vm693, %v689, inf
        %695 = vmin.xlane.f32.xlu0 %v694
        %v696 = vpop.xlane.xlu0 %695
        %v697 = vcvt.f32.s32 %v696
        %v698 = vcvt.f32.s32 %v692
        %v699 = vshll.u32 %v698, 16
        %v700 = vadd.s32 %v699, %v697
        %v701 = vand.u32 %v568, 65535
        %v702 = vshra.s32 %v568, 16
        %v703 = vcvt.s32.f32 %v701
        %v704 = vcvt.s32.f32 %v702
        %705 = vmin.xlane.f32.xlu0 %v704
        %v706 = vpop.xlane.xlu0 %705
        %vm707 = vcmp.eq.f32.partialorder %v704, %v706
        %v708 = vsel %vm707, %v703, inf
        %709 = vmin.xlane.f32.xlu0 %v708
        %v710 = vpop.xlane.xlu0 %709
        %v711 = vcvt.f32.s32 %v710
        %v712 = vcvt.f32.s32 %v706
        %v713 = vshll.u32 %v712, 16
        %v714 = vadd.s32 %v713, %v711
        %v715 = vand.u32 %v569, 65535
        %v716 = vshra.s32 %v569, 16
        %v717 = vcvt.s32.f32 %v715
        %v718 = vcvt.s32.f32 %v716
        %719 = vmin.xlane.f32.xlu0 %v718
        %v720 = vpop.xlane.xlu0 %719
        %vm721 = vcmp.eq.f32.partialorder %v718, %v720
        %v722 = vsel %vm721, %v717, inf
        %723 = vmin.xlane.f32.xlu0 %v722
        %v724 = vpop.xlane.xlu0 %723
        %v725 = vcvt.f32.s32 %v724
        %v726 = vcvt.f32.s32 %v720
        %v727 = vshll.u32 %v726, 16
        %v728 = vadd.s32 %v727, %v725
        %v729 = vand.u32 %v570, 65535
        %v730 = vshra.s32 %v570, 16
        %v731 = vcvt.s32.f32 %v729
        %v732 = vcvt.s32.f32 %v730
        %733 = vmin.xlane.f32.xlu0 %v732
        %v734 = vpop.xlane.xlu0 %733
        %vm735 = vcmp.eq.f32.partialorder %v732, %v734
        %v736 = vsel %vm735, %v731, inf
        %737 = vmin.xlane.f32.xlu0 %v736
        %v738 = vpop.xlane.xlu0 %737
        %v739 = vcvt.f32.s32 %v738
        %v740 = vcvt.f32.s32 %v734
        %v741 = vshll.u32 %v740, 16
        %v742 = vadd.s32 %v741, %v739
        %v743 = vand.u32 %v571, 65535
        %v744 = vshra.s32 %v571, 16
        %v745 = vcvt.s32.f32 %v743
        %v746 = vcvt.s32.f32 %v744
        %747 = vmin.xlane.f32.xlu0 %v746
        %v748 = vpop.xlane.xlu0 %747
        %vm749 = vcmp.eq.f32.partialorder %v746, %v748
        %v750 = vsel %vm749, %v745, inf
        %751 = vmin.xlane.f32.xlu0 %v750
        %v752 = vpop.xlane.xlu0 %751
        %v753 = vcvt.f32.s32 %v752
        %v754 = vcvt.f32.s32 %v748
        %v755 = vshll.u32 %v754, 16
        %v756 = vadd.s32 %v755, %v753
        %v757 = vand.u32 %v572, 65535
        %v758 = vshra.s32 %v572, 16
        %v759 = vcvt.s32.f32 %v757
        %v760 = vcvt.s32.f32 %v758
        %761 = vmin.xlane.f32.xlu0 %v760
        %v762 = vpop.xlane.xlu0 %761
        %vm763 = vcmp.eq.f32.partialorder %v760, %v762
        %v764 = vsel %vm763, %v759, inf
        %765 = vmin.xlane.f32.xlu0 %v764
        %v766 = vpop.xlane.xlu0 %765
        %v767 = vcvt.f32.s32 %v766
        %v768 = vcvt.f32.s32 %v762
        %v769 = vshll.u32 %v768, 16
        %v770 = vadd.s32 %v769, %v767
        %v771 = vand.u32 %v573, 65535
        %v772 = vshra.s32 %v573, 16
        %v773 = vcvt.s32.f32 %v771
        %v774 = vcvt.s32.f32 %v772
        %775 = vmin.xlane.f32.xlu0 %v774
        %v776 = vpop.xlane.xlu0 %775
        %vm777 = vcmp.eq.f32.partialorder %v774, %v776
        %v778 = vsel %vm777, %v773, inf
        %779 = vmin.xlane.f32.xlu0 %v778
        %v780 = vpop.xlane.xlu0 %779
        %v781 = vcvt.f32.s32 %v780
        %v782 = vcvt.f32.s32 %v776
        %v783 = vshll.u32 %v782, 16
        %v784 = vadd.s32 %v783, %v781
        %v785 = vand.u32 %v574, 65535
        %v786 = vshra.s32 %v574, 16
        %v787 = vcvt.s32.f32 %v785
        %v788 = vcvt.s32.f32 %v786
        %789 = vmin.xlane.f32.xlu0 %v788
        %v790 = vpop.xlane.xlu0 %789
        %vm791 = vcmp.eq.f32.partialorder %v788, %v790
        %v792 = vsel %vm791, %v787, inf
        %793 = vmin.xlane.f32.xlu0 %v792
        %v794 = vpop.xlane.xlu0 %793
        %v795 = vcvt.f32.s32 %v794
        %v796 = vcvt.f32.s32 %v790
        %v797 = vshll.u32 %v796, 16
        %v798 = vadd.s32 %v797, %v795
        %s799 = smul.u32 %s23, 128
        %v800 = vstv %s799
        %v801 = vadd.s32 %v800, %v588
        %v802 = vadd.s32 %v800, %v602
        %v803 = vadd.s32 %v800, %v616
        %v804 = vadd.s32 %v800, %v630
        %v805 = vadd.s32 %v800, %v644
        %v806 = vadd.s32 %v800, %v658
        %v807 = vadd.s32 %v800, %v672
        %v808 = vadd.s32 %v800, %v686
        %v809 = vadd.s32 %v800, %v700
        %v810 = vadd.s32 %v800, %v714
        %v811 = vadd.s32 %v800, %v728
        %v812 = vadd.s32 %v800, %v742
        %v813 = vadd.s32 %v800, %v756
        %v814 = vadd.s32 %v800, %v770
        %v815 = vadd.s32 %v800, %v784
        %v816 = vadd.s32 %v800, %v798
        %v817 = vld [vmem:[#allocation2] sm:$0xff]
        %v818 = vld [vmem:[#allocation2 + $0x8] sm:$0xff]
        %v819 = vld [vmem:[#allocation2 + $0x10] sm:$0xff]
        %v820 = vld [vmem:[#allocation2 + $0x18] sm:$0xff]
        %v821 = vld [vmem:[#allocation2 + $0x20] sm:$0xff]
        %v822 = vld [vmem:[#allocation2 + $0x28] sm:$0xff]
        %v823 = vld [vmem:[#allocation2 + $0x30] sm:$0xff]
        %v824 = vld [vmem:[#allocation2 + $0x38] sm:$0xff]
        %v825 = vld [vmem:[#allocation2 + $0x40] sm:$0xff]
        %v826 = vld [vmem:[#allocation2 + $0x48] sm:$0xff]
        %v827 = vld [vmem:[#allocation2 + $0x50] sm:$0xff]
        %v828 = vld [vmem:[#allocation2 + $0x58] sm:$0xff]
        %v829 = vld [vmem:[#allocation2 + $0x60] sm:$0xff]
        %v830 = vld [vmem:[#allocation2 + $0x68] sm:$0xff]
        %v831 = vld [vmem:[#allocation2 + $0x70] sm:$0xff]
        %v832 = vld [vmem:[#allocation2 + $0x78] sm:$0xff]
        %vm833 = vcmp.lt.f32.partialorder %v510, %v817
        %vm834 = vcmp.lt.f32.partialorder %v512, %v818
        %vm835 = vcmp.lt.f32.partialorder %v514, %v819
        %vm836 = vcmp.lt.f32.partialorder %v516, %v820
        %vm837 = vcmp.lt.f32.partialorder %v518, %v821
        %vm838 = vcmp.lt.f32.partialorder %v520, %v822
        %vm839 = vcmp.lt.f32.partialorder %v522, %v823
        %vm840 = vcmp.lt.f32.partialorder %v524, %v824
        %vm841 = vcmp.lt.f32.partialorder %v526, %v825
        %vm842 = vcmp.lt.f32.partialorder %v528, %v826
        %vm843 = vcmp.lt.f32.partialorder %v530, %v827
        %vm844 = vcmp.lt.f32.partialorder %v532, %v828
        %vm845 = vcmp.lt.f32.partialorder %v534, %v829
        %vm846 = vcmp.lt.f32.partialorder %v536, %v830
        %vm847 = vcmp.lt.f32.partialorder %v538, %v831
        %vm848 = vcmp.lt.f32.partialorder %v540, %v832
        %v849 = vsel %vm833, %v510, %v817
        %v850 = vsel %vm834, %v512, %v818
        %v851 = vsel %vm835, %v514, %v819
        %v852 = vsel %vm836, %v516, %v820
        %v853 = vsel %vm837, %v518, %v821
        %v854 = vsel %vm838, %v520, %v822
        %v855 = vsel %vm839, %v522, %v823
        %v856 = vsel %vm840, %v524, %v824
        %v857 = vsel %vm841, %v526, %v825
        %v858 = vsel %vm842, %v528, %v826
        %v859 = vsel %vm843, %v530, %v827
        %v860 = vsel %vm844, %v532, %v828
        %v861 = vsel %vm845, %v534, %v829
        %v862 = vsel %vm846, %v536, %v830
        %v863 = vsel %vm847, %v538, %v831
        %v864 = vsel %vm848, %v540, %v832
        %vm865 = vcmask 7168
        %866 = vst.msk [vmem:[#allocation2] sm:$0xff] %vm865, %v849
        %867 = vst.msk [vmem:[#allocation2 + $0x8] sm:$0xff] %vm865, %v850
        %868 = vst.msk [vmem:[#allocation2 + $0x10] sm:$0xff] %vm865, %v851
        %869 = vst.msk [vmem:[#allocation2 + $0x18] sm:$0xff] %vm865, %v852
        %870 = vst.msk [vmem:[#allocation2 + $0x20] sm:$0xff] %vm865, %v853
        %871 = vst.msk [vmem:[#allocation2 + $0x28] sm:$0xff] %vm865, %v854
        %872 = vst.msk [vmem:[#allocation2 + $0x30] sm:$0xff] %vm865, %v855
        %873 = vst.msk [vmem:[#allocation2 + $0x38] sm:$0xff] %vm865, %v856
        %874 = vst.msk [vmem:[#allocation2 + $0x40] sm:$0xff] %vm865, %v857
        %875 = vst.msk [vmem:[#allocation2 + $0x48] sm:$0xff] %vm865, %v858
        %876 = vst.msk [vmem:[#allocation2 + $0x50] sm:$0xff] %vm865, %v859
        %877 = vst.msk [vmem:[#allocation2 + $0x58] sm:$0xff] %vm865, %v860
        %878 = vst.msk [vmem:[#allocation2 + $0x60] sm:$0xff] %vm865, %v861
        %879 = vst.msk [vmem:[#allocation2 + $0x68] sm:$0xff] %vm865, %v862
        %880 = vst.msk [vmem:[#allocation2 + $0x70] sm:$0xff] %vm865, %v863
        %881 = vst.msk [vmem:[#allocation2 + $0x78] sm:$0xff] %vm865, %v864
        %v882 = vld [vmem:[#allocation3] sm:$0xff]
        %v883 = vld [vmem:[#allocation3 + $0x8] sm:$0xff]
        %v884 = vld [vmem:[#allocation3 + $0x10] sm:$0xff]
        %v885 = vld [vmem:[#allocation3 + $0x18] sm:$0xff]
        %v886 = vld [vmem:[#allocation3 + $0x20] sm:$0xff]
        %v887 = vld [vmem:[#allocation3 + $0x28] sm:$0xff]
        %v888 = vld [vmem:[#allocation3 + $0x30] sm:$0xff]
        %v889 = vld [vmem:[#allocation3 + $0x38] sm:$0xff]
        %v890 = vld [vmem:[#allocation3 + $0x40] sm:$0xff]
        %v891 = vld [vmem:[#allocation3 + $0x48] sm:$0xff]
        %v892 = vld [vmem:[#allocation3 + $0x50] sm:$0xff]
        %v893 = vld [vmem:[#allocation3 + $0x58] sm:$0xff]
        %v894 = vld [vmem:[#allocation3 + $0x60] sm:$0xff]
        %v895 = vld [vmem:[#allocation3 + $0x68] sm:$0xff]
        %v896 = vld [vmem:[#allocation3 + $0x70] sm:$0xff]
        %v897 = vld [vmem:[#allocation3 + $0x78] sm:$0xff]
        %v898 = vsel %vm833, %v801, %v882
        %v899 = vsel %vm834, %v802, %v883
        %v900 = vsel %vm835, %v803, %v884
        %v901 = vsel %vm836, %v804, %v885
        %v902 = vsel %vm837, %v805, %v886
        %v903 = vsel %vm838, %v806, %v887
        %v904 = vsel %vm839, %v807, %v888
        %v905 = vsel %vm840, %v808, %v889
        %v906 = vsel %vm841, %v809, %v890
        %v907 = vsel %vm842, %v810, %v891
        %v908 = vsel %vm843, %v811, %v892
        %v909 = vsel %vm844, %v812, %v893
        %v910 = vsel %vm845, %v813, %v894
        %v911 = vsel %vm846, %v814, %v895
        %v912 = vsel %vm847, %v815, %v896
        %v913 = vsel %vm848, %v816, %v897
        %914 = vst.msk [vmem:[#allocation3] sm:$0xff] %vm865, %v898
        %915 = vst.msk [vmem:[#allocation3 + $0x8] sm:$0xff] %vm865, %v899
        %916 = vst.msk [vmem:[#allocation3 + $0x10] sm:$0xff] %vm865, %v900
        %917 = vst.msk [vmem:[#allocation3 + $0x18] sm:$0xff] %vm865, %v901
        %918 = vst.msk [vmem:[#allocation3 + $0x20] sm:$0xff] %vm865, %v902
        %919 = vst.msk [vmem:[#allocation3 + $0x28] sm:$0xff] %vm865, %v903
        %920 = vst.msk [vmem:[#allocation3 + $0x30] sm:$0xff] %vm865, %v904
        %921 = vst.msk [vmem:[#allocation3 + $0x38] sm:$0xff] %vm865, %v905
        %922 = vst.msk [vmem:[#allocation3 + $0x40] sm:$0xff] %vm865, %v906
        %923 = vst.msk [vmem:[#allocation3 + $0x48] sm:$0xff] %vm865, %v907
        %924 = vst.msk [vmem:[#allocation3 + $0x50] sm:$0xff] %vm865, %v908
        %925 = vst.msk [vmem:[#allocation3 + $0x58] sm:$0xff] %vm865, %v909
        %926 = vst.msk [vmem:[#allocation3 + $0x60] sm:$0xff] %vm865, %v910
        %927 = vst.msk [vmem:[#allocation3 + $0x68] sm:$0xff] %vm865, %v911
        %928 = vst.msk [vmem:[#allocation3 + $0x70] sm:$0xff] %vm865, %v912
        %929 = vst.msk [vmem:[#allocation3 + $0x78] sm:$0xff] %vm865, %v913
        // Predicated region
        $region33: #{tpu_custom_call.1} parent=27 // pred_check
          %p930 = pneg %p214
        $region34: #{tpu_custom_call.1} parent=27 // pred_check_branch
          %932 = sbr.rel (%p930) target = $region36
        $region35: #{tpu_custom_call.1} parent=27 // pred_region
          %v933 = vld [vmem:[#allocation3] sm:$0xff]
          %v934 = vld [vmem:[#allocation3 + $0x8] sm:$0xff]
          %v935 = vld [vmem:[#allocation3 + $0x10] sm:$0xff]
          %v936 = vld [vmem:[#allocation3 + $0x18] sm:$0xff]
          %v937 = vld [vmem:[#allocation3 + $0x20] sm:$0xff]
          %v938 = vld [vmem:[#allocation3 + $0x28] sm:$0xff]
          %v939 = vld [vmem:[#allocation3 + $0x30] sm:$0xff]
          %v940 = vld [vmem:[#allocation3 + $0x38] sm:$0xff]
          %v941 = vld [vmem:[#allocation3 + $0x40] sm:$0xff]
          %v942 = vld [vmem:[#allocation3 + $0x48] sm:$0xff]
          %v943 = vld [vmem:[#allocation3 + $0x50] sm:$0xff]
          %v944 = vld [vmem:[#allocation3 + $0x58] sm:$0xff]
          %v945 = vld [vmem:[#allocation3 + $0x60] sm:$0xff]
          %v946 = vld [vmem:[#allocation3 + $0x68] sm:$0xff]
          %v947 = vld [vmem:[#allocation3 + $0x70] sm:$0xff]
          %v948 = vld [vmem:[#allocation3 + $0x78] sm:$0xff]
          %949 = vset.pattern.permute.xlu0 0
          %950 = vperm.xlu0 %949, %v933
          %v951 = vpop.permute.xlu0 %950
          %952 = vset.pattern.permute.xlu0 0
          %953 = vperm.xlu0 %952, %v934
          %v954 = vpop.permute.xlu0 %953
          %955 = vset.pattern.permute.xlu0 0
          %956 = vperm.xlu0 %955, %v935
          %v957 = vpop.permute.xlu0 %956
          %958 = vset.pattern.permute.xlu0 0
          %959 = vperm.xlu0 %958, %v936
          %v960 = vpop.permute.xlu0 %959
          %961 = vset.pattern.permute.xlu0 0
          %962 = vperm.xlu0 %961, %v937
          %v963 = vpop.permute.xlu0 %962
          %964 = vset.pattern.permute.xlu0 0
          %965 = vperm.xlu0 %964, %v938
          %v966 = vpop.permute.xlu0 %965
          %967 = vset.pattern.permute.xlu0 0
          %968 = vperm.xlu0 %967, %v939
          %v969 = vpop.permute.xlu0 %968
          %970 = vset.pattern.permute.xlu0 0
          %971 = vperm.xlu0 %970, %v940
          %v972 = vpop.permute.xlu0 %971
          %973 = vset.pattern.permute.xlu0 0
          %974 = vperm.xlu0 %973, %v941
          %v975 = vpop.permute.xlu0 %974
          %976 = vset.pattern.permute.xlu0 0
          %977 = vperm.xlu0 %976, %v942
          %v978 = vpop.permute.xlu0 %977
          %979 = vset.pattern.permute.xlu0 0
          %980 = vperm.xlu0 %979, %v943
          %v981 = vpop.permute.xlu0 %980
          %982 = vset.pattern.permute.xlu0 0
          %983 = vperm.xlu0 %982, %v944
          %v984 = vpop.permute.xlu0 %983
          %985 = vset.pattern.permute.xlu0 0
          %986 = vperm.xlu0 %985, %v945
          %v987 = vpop.permute.xlu0 %986
          %988 = vset.pattern.permute.xlu0 0
          %989 = vperm.xlu0 %988, %v946
          %v990 = vpop.permute.xlu0 %989
          %991 = vset.pattern.permute.xlu0 0
          %992 = vperm.xlu0 %991, %v947
          %v993 = vpop.permute.xlu0 %992
          %994 = vset.pattern.permute.xlu0 0
          %995 = vperm.xlu0 %994, %v948
          %v996 = vpop.permute.xlu0 %995
          %v997 = vlaneseq
          %v998 = vshrl.u32 %v997, 7
          %v999 = vsub.s32 %v542, %v998
          %v1000 = vrot.slane %v951, %v999
          %v1001 = vadd.s32 %v542, 4294967288
          %v1002 = vlaneseq
          %v1003 = vshrl.u32 %v1002, 7
          %v1004 = vsub.s32 %v1001, %v1003
          %v1005 = vrot.slane %v954, %v1004
          %vm1006 = vcmask 130112
          %v1007 = vsel %vm1006, %v1005, %v1000
          %v1008 = vadd.s32 %v542, 4294967280
          %v1009 = vlaneseq
          %v1010 = vshrl.u32 %v1009, 7
          %v1011 = vsub.s32 %v1008, %v1010
          %v1012 = vrot.slane %v957, %v1011
          %vm1013 = vcmask 195712
          %v1014 = vsel %vm1013, %v1012, %v1007
          %v1015 = vadd.s32 %v542, 4294967272
          %v1016 = vlaneseq
          %v1017 = vshrl.u32 %v1016, 7
          %v1018 = vsub.s32 %v1015, %v1017
          %v1019 = vrot.slane %v960, %v1018
          %vm1020 = vcmask 261312
          %v1021 = vsel %vm1020, %v1019, %v1014
          %v1022 = vadd.s32 %v542, 4294967264
          %v1023 = vlaneseq
          %v1024 = vshrl.u32 %v1023, 7
          %v1025 = vsub.s32 %v1022, %v1024
          %v1026 = vrot.slane %v963, %v1025
          %vm1027 = vcmask 326912
          %v1028 = vsel %vm1027, %v1026, %v1021
          %v1029 = vadd.s32 %v542, 4294967256
          %v1030 = vlaneseq
          %v1031 = vshrl.u32 %v1030, 7
          %v1032 = vsub.s32 %v1029, %v1031
          %v1033 = vrot.slane %v966, %v1032
          %vm1034 = vcmask 392512
          %v1035 = vsel %vm1034, %v1033, %v1028
          %v1036 = vadd.s32 %v542, 4294967248
          %v1037 = vlaneseq
          %v1038 = vshrl.u32 %v1037, 7
          %v1039 = vsub.s32 %v1036, %v1038
          %v1040 = vrot.slane %v969, %v1039
          %vm1041 = vcmask 458112
          %v1042 = vsel %vm1041, %v1040, %v1035
          %v1043 = vadd.s32 %v542, 4294967240
          %v1044 = vlaneseq
          %v1045 = vshrl.u32 %v1044, 7
          %v1046 = vsub.s32 %v1043, %v1045
          %v1047 = vrot.slane %v972, %v1046
          %vm1048 = vcmask 523712
          %v1049 = vsel %vm1048, %v1047, %v1042
          %v1050 = vadd.s32 %v542, 4294967232
          %v1051 = vlaneseq
          %v1052 = vshrl.u32 %v1051, 7
          %v1053 = vsub.s32 %v1050, %v1052
          %v1054 = vrot.slane %v975, %v1053
          %vm1055 = vcmask 589312
          %v1056 = vsel %vm1055, %v1054, %v1049
          %v1057 = vadd.s32 %v542, 4294967224
          %v1058 = vlaneseq
          %v1059 = vshrl.u32 %v1058, 7
          %v1060 = vsub.s32 %v1057, %v1059
          %v1061 = vrot.slane %v978, %v1060
          %vm1062 = vcmask 654912
          %v1063 = vsel %vm1062, %v1061, %v1056
          %v1064 = vadd.s32 %v542, 4294967216
          %v1065 = vlaneseq
          %v1066 = vshrl.u32 %v1065, 7
          %v1067 = vsub.s32 %v1064, %v1066
          %v1068 = vrot.slane %v981, %v1067
          %vm1069 = vcmask 720512
          %v1070 = vsel %vm1069, %v1068, %v1063
          %v1071 = vadd.s32 %v542, 4294967208
          %v1072 = vlaneseq
          %v1073 = vshrl.u32 %v1072, 7
          %v1074 = vsub.s32 %v1071, %v1073
          %v1075 = vrot.slane %v984, %v1074
          %vm1076 = vcmask 786112
          %v1077 = vsel %vm1076, %v1075, %v1070
          %v1078 = vadd.s32 %v542, 4294967200
          %v1079 = vlaneseq
          %v1080 = vshrl.u32 %v1079, 7
          %v1081 = vsub.s32 %v1078, %v1080
          %v1082 = vrot.slane %v987, %v1081
          %vm1083 = vcmask 851712
          %v1084 = vsel %vm1083, %v1082, %v1077
          %v1085 = vadd.s32 %v542, 4294967192
          %v1086 = vlaneseq
          %v1087 = vshrl.u32 %v1086, 7
          %v1088 = vsub.s32 %v1085, %v1087
          %v1089 = vrot.slane %v990, %v1088
          %vm1090 = vcmask 917312
          %v1091 = vsel %vm1090, %v1089, %v1084
          %v1092 = vadd.s32 %v542, 4294967184
          %v1093 = vlaneseq
          %v1094 = vshrl.u32 %v1093, 7
          %v1095 = vsub.s32 %v1092, %v1094
          %v1096 = vrot.slane %v993, %v1095
          %vm1097 = vcmask 982912
          %v1098 = vsel %vm1097, %v1096, %v1091
          %v1099 = vadd.s32 %v542, 4294967176
          %v1100 = vlaneseq
          %v1101 = vshrl.u32 %v1100, 7
          %v1102 = vsub.s32 %v1099, %v1101
          %v1103 = vrot.slane %v996, %v1102
          %vm1104 = vcmask 1048512
          %v1105 = vsel %vm1104, %v1103, %v1098
          %1106 = vst [vmem:[%s193] sm:$0x1] %v1105
        $region36: #{tpu_custom_call.1} parent=27 // pred_fallthru
          _
        %s1107 = sand.u32 %s101, 1
        %s1108 = scalar_lea.sflag [#allocation5], %s1107
        %s1109 = sand.u32 %s101, 1
        %s1110 = scalar_lea.vmem [#allocation4], %s1109
        // Predicated region
        $region37: #{tpu_custom_call.1} parent=27 // pred_check
          %p1111 = pneg %p111
        $region38: #{tpu_custom_call.1} parent=27 // pred_check_branch
          %1113 = sbr.rel (%p1111) target = $region40
        $region39: #{tpu_custom_call.1} parent=27 // pred_region
          %s1115 = ssub.s32 16, 16
          %1116 = vsyncadd %s1108, %s1115
          %s1117 = sadd.s32 %s22, %s21
          %s1118 = smul.addr %s1117, 16
          %s1119 = scalar_lea.hbm %s2, %s1118
          %s1121 = sshll.u32 %s1110, 4
          %s1122 = int_to_ptr.vmem [resolvable:$true] %s1121
          %1124 = dma.vmem_to_hbm [thread:$0]  %s1122, 16, %s1119, %s1108
        $region40: #{tpu_custom_call.1} parent=27 // pred_fallthru
          _
      $region28: #{tpu_custom_call.1} parent=5 // pred_fallthru
        _
      %p1125 = scmp.le.s32.totalorder 2, %s11
      // Predicated region
      $region41: #{tpu_custom_call.1} parent=5 // pred_check
        %p1126 = pneg %p1125
      $region42: #{tpu_custom_call.1} parent=5 // pred_check_branch
        %1128 = sbr.rel (%p1126) target = $region44
      $region43: #{tpu_custom_call.1} parent=5 // pred_region
        %s1129 = ssub.s32 %s11, 2
        // Predicated region
        $region45: #{tpu_custom_call.1} parent=43 // pred_check
          %p1130 = pneg %p117
        $region46: #{tpu_custom_call.1} parent=43 // pred_check_branch
          %1132 = sbr.rel (%p1130) target = $region48
        $region47: #{tpu_custom_call.1} parent=43 // pred_region
          %s1133 = sand.u32 %s102, 1
          %s1134 = scalar_lea.sflag [#allocation5], %s1133
          %s1135 = sand.u32 %s102, 1
          %s1136 = scalar_lea.vmem [#allocation4], %s1135
          %1137 = dma.done %s1134, 16
        $region48: #{tpu_custom_call.1} parent=43 // pred_fallthru
          _
      $region44: #{tpu_custom_call.1} parent=5 // pred_fallthru
        _
    $region6: #{tpu_custom_call.1} parent=1 // loop_footer
      %s15 = sadd.s32 1, %s11
    $region7: #{tpu_custom_call.1} parent=1 // loop_footer_branch
      %10 = sbr.rel target = $region3
    $region8: #{tpu_custom_call.1} parent=1 // loop_exit
      _
    %1138 = vsyncpa [#allocation5], 1
    %s1139 = scalar_lea.sflag [#allocation5], 1
    %1140 = vsyncpa %s1139, 1

</llo_original>
